<compile_context>
chip_gen: v5e
topology: v5e:2x2
jax: 0.10.0
libtpu: 0.0.40
codegen_flags: <defaults>
</compile_context>

<pallas_src>
import functools

import jax
import jax.numpy as jnp
from jax.experimental import pallas as pl
from jax.experimental.pallas import tpu as pltpu


def _round_up(a, b):
    return (a + b - 1) // b * b


def _kcompetitive_kernel(x_ref, o_ref, *, pos_k, neg_k, alpha, d, feature_axis,
                         unroll_threshold=8):
    """One tile of the k-competitive layer.

    feature_axis == 1: tile is (TM, D), features on lanes (large-D layout).
    feature_axis == 0: tile is (D, TN), features on sublanes (small-D layout,
                       batch on lanes for lane-dense stores).
    """
    x = x_ref[...].astype(jnp.float32)
    pos = jnp.maximum(x, 0.0)       # relu(x)   == (x + |x|)/2
    negmag = jnp.maximum(-x, 0.0)   # relu(-x)  == -(x - |x|)/2

    idx_i = jax.lax.broadcasted_iota(jnp.int32, x.shape, feature_axis)
    idx_f = idx_i.astype(jnp.float32)
    neg_inf = jnp.float32(-jnp.inf)

    def select_one(work):
        # Pick the per-row max; ties broken toward the lowest index
        # (matches lax.top_k / torch.topk ordering), then knock it out by
        # writing -inf.  Inputs are >= 0, so "-inf" uniquely marks selection.
        row_max = jnp.max(work, axis=feature_axis, keepdims=True)
        cand = jnp.where(work == row_max, idx_i, d)
        sel = jnp.min(cand, axis=feature_axis, keepdims=True)
        return jnp.where(idx_i == sel, neg_inf, work)

    max_k = max(pos_k, neg_k)
    min_k = min(pos_k, neg_k)
    pwork, nwork = pos, negmag

    if max_k <= unroll_threshold:
        # Small k: full unroll, POS/NEG steps interleaved in one basic block
        # so the LLO scheduler can overlap the two independent XLU chains.
        for i in range(max_k):
            if i < pos_k:
                pwork = select_one(pwork)
            if i < neg_k:
                nwork = select_one(nwork)
    else:
        # Large k: single fused loop carrying both work arrays to bound vreg
        # live ranges while still exposing two independent reduce chains.
        def body(_, carry):
            pw, nw = carry
            return select_one(pw), select_one(nw)

        pwork, nwork = jax.lax.fori_loop(0, min_k, body, (pwork, nwork),
                                         unroll=2)
        for _ in range(pos_k - min_k):   # at most 1 extra step
            pwork = select_one(pwork)
        for _ in range(neg_k - min_k):   # at most 1 extra step
            nwork = select_one(nwork)

    pos_mask = pwork == neg_inf
    neg_mask = nwork == neg_inf

    # POS branch -- reproduces the reference bug: scattered values are indices.
    pos_tmp = alpha * jnp.sum(pos - jnp.where(pos_mask, idx_f, 0.0),
                              axis=feature_axis, keepdims=True)
    pos_reset = jnp.where(pos_mask, idx_f + pos_tmp, 0.0)

    # NEG branch -- uses the actual top-k magnitudes of the negative part.
    neg_tmp = alpha * jnp.sum(jnp.where(neg_mask, 0.0, negmag),
                              axis=feature_axis, keepdims=True)
    neg_reset = jnp.where(neg_mask, negmag + neg_tmp, 0.0)

    o_ref[...] = (pos_reset - neg_reset).astype(o_ref.dtype)


def k_competitive_layer(x, ktop, alpha_factor, *, block_rows=None,
                        target_block_bytes=1 << 20,
                        vmem_limit_bytes=48 * 1024 * 1024):
    n, d = x.shape
    ktop = min(int(ktop), d)                 # same "resize" behavior as module
    pos_k = ktop // 2
    neg_k = ktop - pos_k
    alpha = float(alpha_factor)
    itemsize = jnp.dtype(x.dtype).itemsize

    # Layout choice: small D -> put the batch on lanes (lane-dense stores).
    transpose_layout = d < 128

    if transpose_layout:
        # Work on x^T of shape (D, N_pad); tile the batch (lane) dim by 128s.
        if block_rows is None:
            tn = target_block_bytes // max(1, d * itemsize)
            tn = max(128, min(4096, (tn // 128) * 128))
        else:
            tn = max(128, _round_up(block_rows, 128))
        n_pad = _round_up(n, 128)
        tn = min(tn, n_pad)
        if n_pad // tn < 2 and n_pad >= 256:   # >=2 tiles for megacore chips
            tn = _round_up(n_pad // 2, 128)
        n_pad = _round_up(n, tn)
        grid = (n_pad // tn,)
        x_in = jnp.pad(x.T, ((0, 0), (0, n_pad - n)))
        block = (d, tn)
        index_map = lambda i: (0, i)
        feature_axis = 0
        inner_shape = (d, n_pad)
    else:
        if block_rows is None:
            tm = target_block_bytes // max(1, d * itemsize)
            tm = max(8, min(1024, (tm // 8) * 8))
        else:
            tm = max(8, (block_rows // 8) * 8)
        n_pad = _round_up(n, 8)
        tm = min(tm, n_pad)
        if n_pad // tm < 2 and n_pad >= 16:    # >=2 tiles for megacore chips
            tm = _round_up(n_pad // 2, 8)
        n_pad = _round_up(n, tm)
        grid = (n_pad // tm,)
        x_in = jnp.pad(x, ((0, n_pad - n), (0, 0)))
        block = (tm, d)
        index_map = lambda i: (i, 0)
        feature_axis = 1
        inner_shape = (n_pad, d)

    kernel = functools.partial(
        _kcompetitive_kernel, pos_k=pos_k, neg_k=neg_k, alpha=alpha, d=d,
        feature_axis=feature_axis)

    cost = pl.CostEstimate(
        flops=int(n_pad * d * (4 * max(ktop, 1) + 12)),
        transcendentals=0,
        bytes_accessed=int(2 * n_pad * d * itemsize))

    out = pl.pallas_call(
        kernel,
        out_shape=jax.ShapeDtypeStruct(inner_shape, x.dtype),
        grid=grid,
        in_specs=[pl.BlockSpec(block, index_map)],
        out_specs=pl.BlockSpec(block, index_map),
        compiler_params=pltpu.CompilerParams(
            dimension_semantics=("parallel",),
            vmem_limit_bytes=int(vmem_limit_bytes)),
        cost_estimate=cost,
    )(x_in)

    if transpose_layout:
        return out[:, :n].T
    return out[:n]


def k_competitive_reference(x, ktop, alpha_factor):
    """Pure-JAX reference mirroring the PyTorch forward (bug included)."""
    n, d = x.shape
    ktop = min(int(ktop), d)
    pos_k = ktop // 2
    neg_k = ktop - pos_k
    absx = jnp.abs(x)
    pos = (x + absx) / 2
    negv = (x - absx) / 2
    rows = jnp.arange(n)[:, None]

    _, pi = jax.lax.top_k(pos, pos_k)
    pvals = pi.astype(jnp.float32)                       # BUG: values <- indices
    pos_reset1 = jnp.zeros_like(x).at[rows, pi].set(pvals)
    pos_tmp = alpha_factor * jnp.sum(pos - pos_reset1, axis=1, keepdims=True)
    pos_reset = jnp.zeros_like(x).at[rows, pi].set(pvals + pos_tmp)

    nv, ni = jax.lax.top_k(-negv, neg_k)
    neg_reset1 = jnp.zeros_like(x).at[rows, ni].set(nv)
    neg_tmp = alpha_factor * jnp.sum(-negv - neg_reset1, axis=1, keepdims=True)
    neg_reset = jnp.zeros_like(x).at[rows, ni].set(nv + neg_tmp)

    return pos_reset - neg_reset


if __name__ == "__main__":
    key = jax.random.PRNGKey(0)

    # Case 1: small feature dim (D < 128) -> transposed, lane-dense layout.
    N1, D1, k1, a1 = 16, 32, 6, 6.26
    x1 = jax.random.normal(key, (N1, D1), dtype=jnp.float32)
    out1 = jax.block_until_ready(k_competitive_layer(x1, k1, a1))
    ref1 = k_competitive_reference(x1, k1, a1)
    assert out1.shape == (N1, D1) and out1.dtype == jnp.float32
    assert jnp.allclose(out1, ref1, atol=1e-4, rtol=1e-4), "mismatch (D=32)"

    # Case 2: D >= 128 and N not a multiple of the tile -> rows layout + padding.
    N2, D2, k2, a2 = 40, 256, 7, 3.5
    x2 = jax.random.normal(jax.random.PRNGKey(1), (N2, D2), dtype=jnp.float32)
    out2 = jax.block_until_ready(k_competitive_layer(x2, k2, a2))
    ref2 = k_competitive_reference(x2, k2, a2)
    assert out2.shape == (N2, D2) and out2.dtype == jnp.float32
    assert jnp.allclose(out2, ref2, atol=1e-4, rtol=1e-4), "mismatch (D=256)"

    # Case 3: larger k -> exercises the fused fori_loop top-k path.
    N3, D3, k3, a3 = 24, 512, 24, 1.0
    x3 = jax.random.normal(jax.random.PRNGKey(2), (N3, D3), dtype=jnp.float32)
    out3 = jax.block_until_ready(k_competitive_layer(x3, k3, a3))
    ref3 = k_competitive_reference(x3, k3, a3)
    assert jnp.allclose(out3, ref3, atol=1e-4, rtol=1e-4), "mismatch (k=24)"

    print("KERNEL_OK")
</pallas_src>

<mosaic_0001>
module attributes {stable_mosaic.version = 11 : i64} {
  func.func @_kcompetitive_kernel(%arg0: i32, %arg1: memref<32x128xf32, #tpu.memory_space<vmem>>, %arg2: memref<32x128xf32, #tpu.memory_space<vmem>>) attributes {dimension_semantics = [#tpu.dimension_semantics<parallel>], iteration_bounds = array<i64: 1>, scalar_prefetch = 0 : i64, scratch_operands = 0 : i64, tpu.core_type = #tpu.core_type<tc>, window_params = [{transform_indices = @transform_0, window_bounds = array<i64: 32, 128>}, {transform_indices = @transform_1, window_bounds = array<i64: 32, 128>}]} {
    %c0 = arith.constant 0 : index
    %c0_0 = arith.constant 0 : index
    %0 = vector.load %arg1[%c0, %c0_0] : memref<32x128xf32, #tpu.memory_space<vmem>>, vector<32x128xf32>
    %cst = arith.constant 0.000000e+00 : f32
    %1 = vector.broadcast %cst : f32 to vector<32x128xf32>
    %2 = arith.maximumf %0, %1 : vector<32x128xf32>
    %cst_1 = arith.constant 0.000000e+00 : f32
    %3 = vector.broadcast %cst_1 : f32 to vector<32x128xf32>
    %4 = arith.subf %3, %0 : vector<32x128xf32>
    %cst_2 = arith.constant 0.000000e+00 : f32
    %5 = vector.broadcast %cst_2 : f32 to vector<32x128xf32>
    %6 = arith.maximumf %4, %5 : vector<32x128xf32>
    %7 = tpu.iota {dimensions = array<i32: 0>} : vector<32x128xi32>
    %8 = arith.sitofp %7 : vector<32x128xi32> to vector<32x128xf32>
    %cst_3 = arith.constant dense<0xFF800000> : vector<128xf32>
    %9 = vector.multi_reduction <maximumf>, %2, %cst_3 [0] : vector<32x128xf32> to vector<128xf32>
    %10 = vector.shape_cast %9 : vector<128xf32> to vector<1x128xf32>
    %11 = vector.broadcast %10 : vector<1x128xf32> to vector<32x128xf32>
    %12 = arith.cmpf oeq, %2, %11 : vector<32x128xf32>
    %c32_i32 = arith.constant 32 : i32
    %13 = vector.broadcast %c32_i32 : i32 to vector<32x128xi32>
    %14 = arith.select %12, %7, %13 : vector<32x128xi1>, vector<32x128xi32>
    %cst_4 = arith.constant dense<2147483647> : vector<128xi32>
    %15 = vector.multi_reduction <minsi>, %14, %cst_4 [0] : vector<32x128xi32> to vector<128xi32>
    %16 = vector.shape_cast %15 : vector<128xi32> to vector<1x128xi32>
    %17 = vector.broadcast %16 : vector<1x128xi32> to vector<32x128xi32>
    %18 = arith.cmpi eq, %7, %17 : vector<32x128xi32>
    %cst_5 = arith.constant 0xFF800000 : f32
    %19 = vector.broadcast %cst_5 : f32 to vector<32x128xf32>
    %20 = arith.select %18, %19, %2 : vector<32x128xi1>, vector<32x128xf32>
    %cst_6 = arith.constant dense<0xFF800000> : vector<128xf32>
    %21 = vector.multi_reduction <maximumf>, %6, %cst_6 [0] : vector<32x128xf32> to vector<128xf32>
    %22 = vector.shape_cast %21 : vector<128xf32> to vector<1x128xf32>
    %23 = vector.broadcast %22 : vector<1x128xf32> to vector<32x128xf32>
    %24 = arith.cmpf oeq, %6, %23 : vector<32x128xf32>
    %c32_i32_7 = arith.constant 32 : i32
    %25 = vector.broadcast %c32_i32_7 : i32 to vector<32x128xi32>
    %26 = arith.select %24, %7, %25 : vector<32x128xi1>, vector<32x128xi32>
    %cst_8 = arith.constant dense<2147483647> : vector<128xi32>
    %27 = vector.multi_reduction <minsi>, %26, %cst_8 [0] : vector<32x128xi32> to vector<128xi32>
    %28 = vector.shape_cast %27 : vector<128xi32> to vector<1x128xi32>
    %29 = vector.broadcast %28 : vector<1x128xi32> to vector<32x128xi32>
    %30 = arith.cmpi eq, %7, %29 : vector<32x128xi32>
    %cst_9 = arith.constant 0xFF800000 : f32
    %31 = vector.broadcast %cst_9 : f32 to vector<32x128xf32>
    %32 = arith.select %30, %31, %6 : vector<32x128xi1>, vector<32x128xf32>
    %cst_10 = arith.constant dense<0xFF800000> : vector<128xf32>
    %33 = vector.multi_reduction <maximumf>, %20, %cst_10 [0] : vector<32x128xf32> to vector<128xf32>
    %34 = vector.shape_cast %33 : vector<128xf32> to vector<1x128xf32>
    %35 = vector.broadcast %34 : vector<1x128xf32> to vector<32x128xf32>
    %36 = arith.cmpf oeq, %20, %35 : vector<32x128xf32>
    %c32_i32_11 = arith.constant 32 : i32
    %37 = vector.broadcast %c32_i32_11 : i32 to vector<32x128xi32>
    %38 = arith.select %36, %7, %37 : vector<32x128xi1>, vector<32x128xi32>
    %cst_12 = arith.constant dense<2147483647> : vector<128xi32>
    %39 = vector.multi_reduction <minsi>, %38, %cst_12 [0] : vector<32x128xi32> to vector<128xi32>
    %40 = vector.shape_cast %39 : vector<128xi32> to vector<1x128xi32>
    %41 = vector.broadcast %40 : vector<1x128xi32> to vector<32x128xi32>
    %42 = arith.cmpi eq, %7, %41 : vector<32x128xi32>
    %cst_13 = arith.constant 0xFF800000 : f32
    %43 = vector.broadcast %cst_13 : f32 to vector<32x128xf32>
    %44 = arith.select %42, %43, %20 : vector<32x128xi1>, vector<32x128xf32>
    %cst_14 = arith.constant dense<0xFF800000> : vector<128xf32>
    %45 = vector.multi_reduction <maximumf>, %32, %cst_14 [0] : vector<32x128xf32> to vector<128xf32>
    %46 = vector.shape_cast %45 : vector<128xf32> to vector<1x128xf32>
    %47 = vector.broadcast %46 : vector<1x128xf32> to vector<32x128xf32>
    %48 = arith.cmpf oeq, %32, %47 : vector<32x128xf32>
    %c32_i32_15 = arith.constant 32 : i32
    %49 = vector.broadcast %c32_i32_15 : i32 to vector<32x128xi32>
    %50 = arith.select %48, %7, %49 : vector<32x128xi1>, vector<32x128xi32>
    %cst_16 = arith.constant dense<2147483647> : vector<128xi32>
    %51 = vector.multi_reduction <minsi>, %50, %cst_16 [0] : vector<32x128xi32> to vector<128xi32>
    %52 = vector.shape_cast %51 : vector<128xi32> to vector<1x128xi32>
    %53 = vector.broadcast %52 : vector<1x128xi32> to vector<32x128xi32>
    %54 = arith.cmpi eq, %7, %53 : vector<32x128xi32>
    %cst_17 = arith.constant 0xFF800000 : f32
    %55 = vector.broadcast %cst_17 : f32 to vector<32x128xf32>
    %56 = arith.select %54, %55, %32 : vector<32x128xi1>, vector<32x128xf32>
    %cst_18 = arith.constant dense<0xFF800000> : vector<128xf32>
    %57 = vector.multi_reduction <maximumf>, %44, %cst_18 [0] : vector<32x128xf32> to vector<128xf32>
    %58 = vector.shape_cast %57 : vector<128xf32> to vector<1x128xf32>
    %59 = vector.broadcast %58 : vector<1x128xf32> to vector<32x128xf32>
    %60 = arith.cmpf oeq, %44, %59 : vector<32x128xf32>
    %c32_i32_19 = arith.constant 32 : i32
    %61 = vector.broadcast %c32_i32_19 : i32 to vector<32x128xi32>
    %62 = arith.select %60, %7, %61 : vector<32x128xi1>, vector<32x128xi32>
    %cst_20 = arith.constant dense<2147483647> : vector<128xi32>
    %63 = vector.multi_reduction <minsi>, %62, %cst_20 [0] : vector<32x128xi32> to vector<128xi32>
    %64 = vector.shape_cast %63 : vector<128xi32> to vector<1x128xi32>
    %65 = vector.broadcast %64 : vector<1x128xi32> to vector<32x128xi32>
    %66 = arith.cmpi eq, %7, %65 : vector<32x128xi32>
    %cst_21 = arith.constant 0xFF800000 : f32
    %67 = vector.broadcast %cst_21 : f32 to vector<32x128xf32>
    %68 = arith.select %66, %67, %44 : vector<32x128xi1>, vector<32x128xf32>
    %cst_22 = arith.constant dense<0xFF800000> : vector<128xf32>
    %69 = vector.multi_reduction <maximumf>, %56, %cst_22 [0] : vector<32x128xf32> to vector<128xf32>
    %70 = vector.shape_cast %69 : vector<128xf32> to vector<1x128xf32>
    %71 = vector.broadcast %70 : vector<1x128xf32> to vector<32x128xf32>
    %72 = arith.cmpf oeq, %56, %71 : vector<32x128xf32>
    %c32_i32_23 = arith.constant 32 : i32
    %73 = vector.broadcast %c32_i32_23 : i32 to vector<32x128xi32>
    %74 = arith.select %72, %7, %73 : vector<32x128xi1>, vector<32x128xi32>
    %cst_24 = arith.constant dense<2147483647> : vector<128xi32>
    %75 = vector.multi_reduction <minsi>, %74, %cst_24 [0] : vector<32x128xi32> to vector<128xi32>
    %76 = vector.shape_cast %75 : vector<128xi32> to vector<1x128xi32>
    %77 = vector.broadcast %76 : vector<1x128xi32> to vector<32x128xi32>
    %78 = arith.cmpi eq, %7, %77 : vector<32x128xi32>
    %cst_25 = arith.constant 0xFF800000 : f32
    %79 = vector.broadcast %cst_25 : f32 to vector<32x128xf32>
    %80 = arith.select %78, %79, %56 : vector<32x128xi1>, vector<32x128xf32>
    %cst_26 = arith.constant 0xFF800000 : f32
    %81 = vector.broadcast %cst_26 : f32 to vector<32x128xf32>
    %82 = arith.cmpf oeq, %68, %81 : vector<32x128xf32>
    %cst_27 = arith.constant 0xFF800000 : f32
    %83 = vector.broadcast %cst_27 : f32 to vector<32x128xf32>
    %84 = arith.cmpf oeq, %80, %83 : vector<32x128xf32>
    %cst_28 = arith.constant 0.000000e+00 : f32
    %85 = vector.broadcast %cst_28 : f32 to vector<32x128xf32>
    %86 = arith.select %82, %8, %85 : vector<32x128xi1>, vector<32x128xf32>
    %87 = arith.subf %2, %86 : vector<32x128xf32>
    %cst_29 = arith.constant dense<0.000000e+00> : vector<128xf32>
    %88 = vector.multi_reduction <add>, %87, %cst_29 [0] : vector<32x128xf32> to vector<128xf32>
    %89 = vector.shape_cast %88 : vector<128xf32> to vector<1x128xf32>
    %cst_30 = arith.constant 6.260000e+00 : f32
    %90 = vector.broadcast %cst_30 : f32 to vector<1x128xf32>
    %91 = arith.mulf %90, %89 : vector<1x128xf32>
    %92 = vector.broadcast %91 : vector<1x128xf32> to vector<32x128xf32>
    %93 = arith.addf %8, %92 : vector<32x128xf32>
    %cst_31 = arith.constant 0.000000e+00 : f32
    %94 = vector.broadcast %cst_31 : f32 to vector<32x128xf32>
    %95 = arith.select %82, %93, %94 : vector<32x128xi1>, vector<32x128xf32>
    %cst_32 = arith.constant 0.000000e+00 : f32
    %96 = vector.broadcast %cst_32 : f32 to vector<32x128xf32>
    %97 = arith.select %84, %96, %6 : vector<32x128xi1>, vector<32x128xf32>
    %cst_33 = arith.constant dense<0.000000e+00> : vector<128xf32>
    %98 = vector.multi_reduction <add>, %97, %cst_33 [0] : vector<32x128xf32> to vector<128xf32>
    %99 = vector.shape_cast %98 : vector<128xf32> to vector<1x128xf32>
    %cst_34 = arith.constant 6.260000e+00 : f32
    %100 = vector.broadcast %cst_34 : f32 to vector<1x128xf32>
    %101 = arith.mulf %100, %99 : vector<1x128xf32>
    %102 = vector.broadcast %101 : vector<1x128xf32> to vector<32x128xf32>
    %103 = arith.addf %6, %102 : vector<32x128xf32>
    %cst_35 = arith.constant 0.000000e+00 : f32
    %104 = vector.broadcast %cst_35 : f32 to vector<32x128xf32>
    %105 = arith.select %84, %103, %104 : vector<32x128xi1>, vector<32x128xf32>
    %106 = arith.subf %95, %105 : vector<32x128xf32>
    %c0_36 = arith.constant 0 : index
    %c0_37 = arith.constant 0 : index
    %107 = vector.load %arg2[%c0_36, %c0_37] : memref<32x128xf32, #tpu.memory_space<vmem>>, vector<32x128xf32>
    tpu.vector_store %arg2[%c0_36, %c0_37], %106 {strides = array<i32>} : memref<32x128xf32, #tpu.memory_space<vmem>>, vector<32x128xf32>,
    return
  }
  func.func @transform_0(%arg0: i32) -> (i32, i32) {
    %c0_i32 = arith.constant 0 : i32
    %c0_i32_0 = arith.constant 0 : i32
    return %c0_i32, %arg0 : i32, i32
  }
  func.func @transform_1(%arg0: i32) -> (i32, i32) {
    %c0_i32 = arith.constant 0 : i32
    %c0_i32_0 = arith.constant 0 : i32
    return %c0_i32, %arg0 : i32, i32
  }
}

</mosaic_0001>

<llo_original>
// kernel: tpu_custom_call.1
$region0: #{tpu_custom_call.1}
  #allocation0 [shape = 'u32[]', space=smem, size = 0x4, offset = 0x4, fixed_abs, tag = 'smem constant byte address 0x4 - core index']
  #allocation1 [shape = 'u32[72,128]{1,0:T(1,128)}', space=vmem, size = 0x9000, scoped, tag = 'internal scratch']
  %s0 = inlined_call_operand.hbm [shape: f32[32,128], index: 0, kind: input, shape index: {}]
  %s1 = inlined_call_operand.hbm [shape: f32[32,128], index: 1, kind: output, shape index: {}]
  %s2 = sld [smem:[#allocation0]]
  $region18: #{tpu_custom_call.1} parent=0
    _
  %s4 = ssub.s32 1, %s2
  %s5 = scalar_select 0, %s4, %s2
  $region1: #{tpu_custom_call.1} parent=0
    #allocation2 [shape = 'u8[16384]{0}', space=vmem, size = 0x4000, scoped, tag = 'input window, operand 0, single buffered']
    #allocation3 [shape = 's32[1]{0}', space=sflag, size = 0x4, scoped, tag = 'scoped memory for tpu_custom_call.1']
    #allocation4 [shape = 's32[1]{0}', space=sflag, size = 0x4, scoped, tag = 'scoped memory for tpu_custom_call.1']
    #allocation5 [shape = 'u8[16384]{0}', space=vmem, size = 0x4000, scoped, tag = 'output window, operand 0, single buffered']
    %6 = vsyncpa [#allocation3], 0
    %7 = vsyncpa [#allocation4], 0
    // Predicated region
    $region2: #{tpu_custom_call.1} parent=1 // pred_check
      _
    $region3: #{tpu_custom_call.1} parent=1 // pred_check_branch
      %9 = sbr.rel (0) target = $region5
    $region4: #{tpu_custom_call.1} parent=1 // pred_region
      %11 = vsyncadd [#allocation3], 0
      %s12 = sshll.u32 %s0, 4
      %s13 = int_to_ptr.hbm [resolvable:$true] %s12
      %s14 = sshll.u32 [#allocation2], 4
      %s15 = int_to_ptr.vmem [resolvable:$true] %s14
      %20 = dma.hbm_to_vmem [thread:$0]  %s13, 512, %s15, [#allocation3], 128, 128, 8
    $region5: #{tpu_custom_call.1} parent=1 // pred_fallthru
      _
    // Predicated region
    $region6: #{tpu_custom_call.1} parent=1 // pred_check
      _
    $region7: #{tpu_custom_call.1} parent=1 // pred_check_branch
      %22 = sbr.rel (0) target = $region9
    $region8: #{tpu_custom_call.1} parent=1 // pred_region
      %24 = dma.done [#allocation3], 512
    $region9: #{tpu_custom_call.1} parent=1 // pred_fallthru
      _
    %v25 = vld [vmem:[#allocation2] sm:$0xff]
    %v26 = vld [vmem:[#allocation2 + $0x8] sm:$0xff]
    %v27 = vld [vmem:[#allocation2 + $0x10] sm:$0xff]
    %v28 = vld [vmem:[#allocation2 + $0x18] sm:$0xff]
    %v29 = vmax.f32 %v25, 0.0
    %v30 = vmax.f32 %v26, 0.0
    %v31 = vmax.f32 %v27, 0.0
    %v32 = vmax.f32 %v28, 0.0
    %v33 = vsub.f32 0.0, %v25
    %v34 = vsub.f32 0.0, %v26
    %v35 = vsub.f32 0.0, %v27
    %v36 = vsub.f32 0.0, %v28
    %v37 = vmax.f32 %v33, 0.0
    %v38 = vmax.f32 %v34, 0.0
    %v39 = vmax.f32 %v35, 0.0
    %v40 = vmax.f32 %v36, 0.0
    %v41 = vlaneseq
    %v42 = vshrl.u32 %v41, 7
    %v43 = vadd.s32 %v42, 8
    %v44 = vadd.s32 %v42, 16
    %v45 = vadd.s32 %v42, 24
    %v46 = vcvt.s32.f32 %v42
    %v47 = vcvt.s32.f32 %v43
    %v48 = vcvt.s32.f32 %v44
    %v49 = vcvt.s32.f32 %v45
    %v50 = vmax.f32 %v29, %v30
    %v51 = vmax.f32 %v31, %v32
    %v52 = vmax.f32 %v50, %v51
    %v53 = vrot.slane %v52, 4
    %v54 = vmax.f32 %v52, %v53
    %v55 = vrot.slane %v54, 2
    %v56 = vmax.f32 %v54, %v55
    %v57 = vrot.slane %v56, 1
    %v58 = vmax.f32 %v56, %v57
    %vm59 = vcmp.eq.f32.partialorder %v29, %v58
    %vm60 = vcmp.eq.f32.partialorder %v30, %v58
    %vm61 = vcmp.eq.f32.partialorder %v31, %v58
    %vm62 = vcmp.eq.f32.partialorder %v32, %v58
    %v63 = vsel %vm59, %v42, 32
    %v64 = vsel %vm60, %v43, 32
    %v65 = vsel %vm61, %v44, 32
    %v66 = vsel %vm62, %v45, 32
    %vm67 = vcmp.lt.s32.totalorder %v63, %v64
    %v68 = vsel %vm67, %v63, %v64
    %vm69 = vcmp.lt.s32.totalorder %v65, %v66
    %v70 = vsel %vm69, %v65, %v66
    %vm71 = vcmp.lt.s32.totalorder %v68, %v70
    %v72 = vsel %vm71, %v68, %v70
    %v73 = vrot.slane %v72, 4
    %vm74 = vcmp.lt.s32.totalorder %v72, %v73
    %v75 = vsel %vm74, %v72, %v73
    %v76 = vrot.slane %v75, 2
    %vm77 = vcmp.lt.s32.totalorder %v75, %v76
    %v78 = vsel %vm77, %v75, %v76
    %v79 = vrot.slane %v78, 1
    %vm80 = vcmp.lt.s32.totalorder %v78, %v79
    %v81 = vsel %vm80, %v78, %v79
    %vm82 = vcmp.eq.s32.totalorder %v42, %v81
    %vm83 = vcmp.eq.s32.totalorder %v43, %v81
    %vm84 = vcmp.eq.s32.totalorder %v44, %v81
    %vm85 = vcmp.eq.s32.totalorder %v45, %v81
    %v86 = vsel %vm82, -inf, %v29
    %v87 = vsel %vm83, -inf, %v30
    %v88 = vsel %vm84, -inf, %v31
    %v89 = vsel %vm85, -inf, %v32
    %v90 = vmax.f32 %v37, %v38
    %v91 = vmax.f32 %v39, %v40
    %v92 = vmax.f32 %v90, %v91
    %v93 = vrot.slane %v92, 4
    %v94 = vmax.f32 %v92, %v93
    %v95 = vrot.slane %v94, 2
    %v96 = vmax.f32 %v94, %v95
    %v97 = vrot.slane %v96, 1
    %v98 = vmax.f32 %v96, %v97
    %vm99 = vcmp.eq.f32.partialorder %v37, %v98
    %vm100 = vcmp.eq.f32.partialorder %v38, %v98
    %vm101 = vcmp.eq.f32.partialorder %v39, %v98
    %vm102 = vcmp.eq.f32.partialorder %v40, %v98
    %v103 = vsel %vm99, %v42, 32
    %v104 = vsel %vm100, %v43, 32
    %v105 = vsel %vm101, %v44, 32
    %v106 = vsel %vm102, %v45, 32
    %vm107 = vcmp.lt.s32.totalorder %v103, %v104
    %v108 = vsel %vm107, %v103, %v104
    %vm109 = vcmp.lt.s32.totalorder %v105, %v106
    %v110 = vsel %vm109, %v105, %v106
    %vm111 = vcmp.lt.s32.totalorder %v108, %v110
    %v112 = vsel %vm111, %v108, %v110
    %v113 = vrot.slane %v112, 4
    %vm114 = vcmp.lt.s32.totalorder %v112, %v113
    %v115 = vsel %vm114, %v112, %v113
    %v116 = vrot.slane %v115, 2
    %vm117 = vcmp.lt.s32.totalorder %v115, %v116
    %v118 = vsel %vm117, %v115, %v116
    %v119 = vrot.slane %v118, 1
    %vm120 = vcmp.lt.s32.totalorder %v118, %v119
    %v121 = vsel %vm120, %v118, %v119
    %vm122 = vcmp.eq.s32.totalorder %v42, %v121
    %vm123 = vcmp.eq.s32.totalorder %v43, %v121
    %vm124 = vcmp.eq.s32.totalorder %v44, %v121
    %vm125 = vcmp.eq.s32.totalorder %v45, %v121
    %v126 = vsel %vm122, -inf, %v37
    %v127 = vsel %vm123, -inf, %v38
    %v128 = vsel %vm124, -inf, %v39
    %v129 = vsel %vm125, -inf, %v40
    %v130 = vmax.f32 %v86, %v87
    %v131 = vmax.f32 %v88, %v89
    %v132 = vmax.f32 %v130, %v131
    %v133 = vrot.slane %v132, 4
    %v134 = vmax.f32 %v132, %v133
    %v135 = vrot.slane %v134, 2
    %v136 = vmax.f32 %v134, %v135
    %v137 = vrot.slane %v136, 1
    %v138 = vmax.f32 %v136, %v137
    %vm139 = vcmp.eq.f32.partialorder %v86, %v138
    %vm140 = vcmp.eq.f32.partialorder %v87, %v138
    %vm141 = vcmp.eq.f32.partialorder %v88, %v138
    %vm142 = vcmp.eq.f32.partialorder %v89, %v138
    %v143 = vsel %vm139, %v42, 32
    %v144 = vsel %vm140, %v43, 32
    %v145 = vsel %vm141, %v44, 32
    %v146 = vsel %vm142, %v45, 32
    %vm147 = vcmp.lt.s32.totalorder %v143, %v144
    %v148 = vsel %vm147, %v143, %v144
    %vm149 = vcmp.lt.s32.totalorder %v145, %v146
    %v150 = vsel %vm149, %v145, %v146
    %vm151 = vcmp.lt.s32.totalorder %v148, %v150
    %v152 = vsel %vm151, %v148, %v150
    %v153 = vrot.slane %v152, 4
    %vm154 = vcmp.lt.s32.totalorder %v152, %v153
    %v155 = vsel %vm154, %v152, %v153
    %v156 = vrot.slane %v155, 2
    %vm157 = vcmp.lt.s32.totalorder %v155, %v156
    %v158 = vsel %vm157, %v155, %v156
    %v159 = vrot.slane %v158, 1
    %vm160 = vcmp.lt.s32.totalorder %v158, %v159
    %v161 = vsel %vm160, %v158, %v159
    %vm162 = vcmp.eq.s32.totalorder %v42, %v161
    %vm163 = vcmp.eq.s32.totalorder %v43, %v161
    %vm164 = vcmp.eq.s32.totalorder %v44, %v161
    %vm165 = vcmp.eq.s32.totalorder %v45, %v161
    %v166 = vsel %vm162, -inf, %v86
    %v167 = vsel %vm163, -inf, %v87
    %v168 = vsel %vm164, -inf, %v88
    %v169 = vsel %vm165, -inf, %v89
    %v170 = vmax.f32 %v126, %v127
    %v171 = vmax.f32 %v128, %v129
    %v172 = vmax.f32 %v170, %v171
    %v173 = vrot.slane %v172, 4
    %v174 = vmax.f32 %v172, %v173
    %v175 = vrot.slane %v174, 2
    %v176 = vmax.f32 %v174, %v175
    %v177 = vrot.slane %v176, 1
    %v178 = vmax.f32 %v176, %v177
    %vm179 = vcmp.eq.f32.partialorder %v126, %v178
    %vm180 = vcmp.eq.f32.partialorder %v127, %v178
    %vm181 = vcmp.eq.f32.partialorder %v128, %v178
    %vm182 = vcmp.eq.f32.partialorder %v129, %v178
    %v183 = vsel %vm179, %v42, 32
    %v184 = vsel %vm180, %v43, 32
    %v185 = vsel %vm181, %v44, 32
    %v186 = vsel %vm182, %v45, 32
    %vm187 = vcmp.lt.s32.totalorder %v183, %v184
    %v188 = vsel %vm187, %v183, %v184
    %vm189 = vcmp.lt.s32.totalorder %v185, %v186
    %v190 = vsel %vm189, %v185, %v186
    %vm191 = vcmp.lt.s32.totalorder %v188, %v190
    %v192 = vsel %vm191, %v188, %v190
    %v193 = vrot.slane %v192, 4
    %vm194 = vcmp.lt.s32.totalorder %v192, %v193
    %v195 = vsel %vm194, %v192, %v193
    %v196 = vrot.slane %v195, 2
    %vm197 = vcmp.lt.s32.totalorder %v195, %v196
    %v198 = vsel %vm197, %v195, %v196
    %v199 = vrot.slane %v198, 1
    %vm200 = vcmp.lt.s32.totalorder %v198, %v199
    %v201 = vsel %vm200, %v198, %v199
    %vm202 = vcmp.eq.s32.totalorder %v42, %v201
    %vm203 = vcmp.eq.s32.totalorder %v43, %v201
    %vm204 = vcmp.eq.s32.totalorder %v44, %v201
    %vm205 = vcmp.eq.s32.totalorder %v45, %v201
    %v206 = vsel %vm202, -inf, %v126
    %v207 = vsel %vm203, -inf, %v127
    %v208 = vsel %vm204, -inf, %v128
    %v209 = vsel %vm205, -inf, %v129
    %v210 = vmax.f32 %v166, %v167
    %v211 = vmax.f32 %v168, %v169
    %v212 = vmax.f32 %v210, %v211
    %v213 = vrot.slane %v212, 4
    %v214 = vmax.f32 %v212, %v213
    %v215 = vrot.slane %v214, 2
    %v216 = vmax.f32 %v214, %v215
    %v217 = vrot.slane %v216, 1
    %v218 = vmax.f32 %v216, %v217
    %vm219 = vcmp.eq.f32.partialorder %v166, %v218
    %vm220 = vcmp.eq.f32.partialorder %v167, %v218
    %vm221 = vcmp.eq.f32.partialorder %v168, %v218
    %vm222 = vcmp.eq.f32.partialorder %v169, %v218
    %v223 = vsel %vm219, %v42, 32
    %v224 = vsel %vm220, %v43, 32
    %v225 = vsel %vm221, %v44, 32
    %v226 = vsel %vm222, %v45, 32
    %vm227 = vcmp.lt.s32.totalorder %v223, %v224
    %v228 = vsel %vm227, %v223, %v224
    %vm229 = vcmp.lt.s32.totalorder %v225, %v226
    %v230 = vsel %vm229, %v225, %v226
    %vm231 = vcmp.lt.s32.totalorder %v228, %v230
    %v232 = vsel %vm231, %v228, %v230
    %v233 = vrot.slane %v232, 4
    %vm234 = vcmp.lt.s32.totalorder %v232, %v233
    %v235 = vsel %vm234, %v232, %v233
    %v236 = vrot.slane %v235, 2
    %vm237 = vcmp.lt.s32.totalorder %v235, %v236
    %v238 = vsel %vm237, %v235, %v236
    %v239 = vrot.slane %v238, 1
    %vm240 = vcmp.lt.s32.totalorder %v238, %v239
    %v241 = vsel %vm240, %v238, %v239
    %vm242 = vcmp.eq.s32.totalorder %v42, %v241
    %vm243 = vcmp.eq.s32.totalorder %v43, %v241
    %vm244 = vcmp.eq.s32.totalorder %v44, %v241
    %vm245 = vcmp.eq.s32.totalorder %v45, %v241
    %v246 = vsel %vm242, -inf, %v166
    %v247 = vsel %vm243, -inf, %v167
    %v248 = vsel %vm244, -inf, %v168
    %v249 = vsel %vm245, -inf, %v169
    %v250 = vmax.f32 %v206, %v207
    %v251 = vmax.f32 %v208, %v209
    %v252 = vmax.f32 %v250, %v251
    %v253 = vrot.slane %v252, 4
    %v254 = vmax.f32 %v252, %v253
    %v255 = vrot.slane %v254, 2
    %v256 = vmax.f32 %v254, %v255
    %v257 = vrot.slane %v256, 1
    %v258 = vmax.f32 %v256, %v257
    %vm259 = vcmp.eq.f32.partialorder %v206, %v258
    %vm260 = vcmp.eq.f32.partialorder %v207, %v258
    %vm261 = vcmp.eq.f32.partialorder %v208, %v258
    %vm262 = vcmp.eq.f32.partialorder %v209, %v258
    %v263 = vsel %vm259, %v42, 32
    %v264 = vsel %vm260, %v43, 32
    %v265 = vsel %vm261, %v44, 32
    %v266 = vsel %vm262, %v45, 32
    %vm267 = vcmp.lt.s32.totalorder %v263, %v264
    %v268 = vsel %vm267, %v263, %v264
    %vm269 = vcmp.lt.s32.totalorder %v265, %v266
    %v270 = vsel %vm269, %v265, %v266
    %vm271 = vcmp.lt.s32.totalorder %v268, %v270
    %v272 = vsel %vm271, %v268, %v270
    %v273 = vrot.slane %v272, 4
    %vm274 = vcmp.lt.s32.totalorder %v272, %v273
    %v275 = vsel %vm274, %v272, %v273
    %v276 = vrot.slane %v275, 2
    %vm277 = vcmp.lt.s32.totalorder %v275, %v276
    %v278 = vsel %vm277, %v275, %v276
    %v279 = vrot.slane %v278, 1
    %vm280 = vcmp.lt.s32.totalorder %v278, %v279
    %v281 = vsel %vm280, %v278, %v279
    %vm282 = vcmp.eq.s32.totalorder %v42, %v281
    %vm283 = vcmp.eq.s32.totalorder %v43, %v281
    %vm284 = vcmp.eq.s32.totalorder %v44, %v281
    %vm285 = vcmp.eq.s32.totalorder %v45, %v281
    %v286 = vsel %vm282, -inf, %v206
    %v287 = vsel %vm283, -inf, %v207
    %v288 = vsel %vm284, -inf, %v208
    %v289 = vsel %vm285, -inf, %v209
    %vm290 = vcmp.eq.f32.partialorder %v246, -inf
    %vm291 = vcmp.eq.f32.partialorder %v247, -inf
    %vm292 = vcmp.eq.f32.partialorder %v248, -inf
    %vm293 = vcmp.eq.f32.partialorder %v249, -inf
    %vm294 = vcmp.eq.f32.partialorder %v286, -inf
    %vm295 = vcmp.eq.f32.partialorder %v287, -inf
    %vm296 = vcmp.eq.f32.partialorder %v288, -inf
    %vm297 = vcmp.eq.f32.partialorder %v289, -inf
    %v298 = vsel %vm290, %v46, 0.0
    %v299 = vsel %vm291, %v47, 0.0
    %v300 = vsel %vm292, %v48, 0.0
    %v301 = vsel %vm293, %v49, 0.0
    %v302 = vsub.f32 %v29, %v298
    %v303 = vsub.f32 %v30, %v299
    %v304 = vsub.f32 %v31, %v300
    %v305 = vsub.f32 %v32, %v301
    %v306 = vadd.f32 %v302, %v303
    %v307 = vadd.f32 %v306, %v304
    %v308 = vadd.f32 %v307, %v305
    %v309 = vrot.slane %v308, 4
    %v310 = vadd.f32 %v308, %v309
    %v311 = vrot.slane %v310, 2
    %v312 = vadd.f32 %v310, %v311
    %v313 = vrot.slane %v312, 1
    %v314 = vadd.f32 %v312, %v313
    %v315 = vmul.f32 %v314, 6.26
    %v316 = vadd.f32 %v46, %v315
    %v317 = vadd.f32 %v47, %v315
    %v318 = vadd.f32 %v48, %v315
    %v319 = vadd.f32 %v49, %v315
    %v320 = vsel %vm290, %v316, 0.0
    %v321 = vsel %vm291, %v317, 0.0
    %v322 = vsel %vm292, %v318, 0.0
    %v323 = vsel %vm293, %v319, 0.0
    %v324 = vsel %vm294, 0.0, %v37
    %v325 = vsel %vm295, 0.0, %v38
    %v326 = vsel %vm296, 0.0, %v39
    %v327 = vsel %vm297, 0.0, %v40
    %v328 = vadd.f32 %v324, %v325
    %v329 = vadd.f32 %v328, %v326
    %v330 = vadd.f32 %v329, %v327
    %v331 = vrot.slane %v330, 4
    %v332 = vadd.f32 %v330, %v331
    %v333 = vrot.slane %v332, 2
    %v334 = vadd.f32 %v332, %v333
    %v335 = vrot.slane %v334, 1
    %v336 = vadd.f32 %v334, %v335
    %v337 = vmul.f32 %v336, 6.26
    %v338 = vadd.f32 %v37, %v337
    %v339 = vadd.f32 %v38, %v337
    %v340 = vadd.f32 %v39, %v337
    %v341 = vadd.f32 %v40, %v337
    %v342 = vsel %vm294, %v338, 0.0
    %v343 = vsel %vm295, %v339, 0.0
    %v344 = vsel %vm296, %v340, 0.0
    %v345 = vsel %vm297, %v341, 0.0
    %v346 = vsub.f32 %v320, %v342
    %v347 = vsub.f32 %v321, %v343
    %v348 = vsub.f32 %v322, %v344
    %v349 = vsub.f32 %v323, %v345
    %350 = vst [vmem:[#allocation5] sm:$0xff] %v346
    %351 = vst [vmem:[#allocation5 + $0x8] sm:$0xff] %v347
    %352 = vst [vmem:[#allocation5 + $0x10] sm:$0xff] %v348
    %353 = vst [vmem:[#allocation5 + $0x18] sm:$0xff] %v349
    // Predicated region
    $region10: #{tpu_custom_call.1} parent=1 // pred_check
      _
    $region11: #{tpu_custom_call.1} parent=1 // pred_check_branch
      %355 = sbr.rel (0) target = $region13
    $region12: #{tpu_custom_call.1} parent=1 // pred_region
      %357 = vsyncadd [#allocation4], 0
      %s358 = sshll.u32 [#allocation5], 4
      %s359 = int_to_ptr.vmem [resolvable:$true] %s358
      %s360 = sshll.u32 %s1, 4
      %s361 = int_to_ptr.hbm [resolvable:$true] %s360
      %366 = dma.vmem_to_hbm [thread:$0]  %s359, 512, %s361, [#allocation4], 128, 128, 8
    $region13: #{tpu_custom_call.1} parent=1 // pred_fallthru
      _
    // Predicated region
    $region14: #{tpu_custom_call.1} parent=1 // pred_check
      _
    $region15: #{tpu_custom_call.1} parent=1 // pred_check_branch
      %368 = sbr.rel (0) target = $region17
    $region16: #{tpu_custom_call.1} parent=1 // pred_region
      %370 = dma.done [#allocation4], 512
    $region17: #{tpu_custom_call.1} parent=1 // pred_fallthru
      _
    %371 = vsyncpa [#allocation3], 1
    %372 = vsyncpa [#allocation4], 1

</llo_original>
